<compile_context>
chip_gen: v6e
topology: v6e:2x2x1
jax: 0.10.0
libtpu: 0.0.40
codegen_flags: <defaults>
</compile_context>

<pallas_src>
import functools

import jax
import jax.numpy as jnp
from jax.experimental import pallas as pl
from jax.experimental.pallas import tpu as pltpu


def _round_up(n, m):
    return ((n + m - 1) // m) * m


def _laplacian_diffusion_kernel(x_ref, evals_ref, time_ref, power_ref, o_ref,
                                *, with_power):
    x = x_ref[...].astype(jnp.float32)                 # (TILE_K, C)
    ev = evals_ref[...].astype(jnp.float32)            # (TILE_K, 1)
    t = jnp.abs(time_ref[...].astype(jnp.float32))     # (1, C)

    neg_ev_t = -ev * t                                  # (TILE_K, C)

    if with_power:
        p_raw = power_ref[...].astype(jnp.float32)                 # (1, C)
        exponent = 2.0 * jax.nn.sigmoid(p_raw) - 1.0               # (1, C), in (-1, 1)

        pos = ev > 0.0                                             # (TILE_K, 1)
        safe_log_ev = jnp.log(jnp.where(pos, ev, 1.0))             # (TILE_K, 1), cheap
        # Fused: ev**p * exp(-ev*t) == exp(p*log(ev) - ev*t)  -> one big exp.
        coef = jnp.exp(exponent * safe_log_ev + neg_ev_t)          # (TILE_K, C)

        # torch.pow(0, p): p>0 -> 0, p==0 -> 1, p<0 -> inf.  exp(-0*t) == 1,
        # so for ev == 0 the full coefficient is just 0**p.
        zero_pow = jnp.where(exponent > 0.0, 0.0,
                             jnp.where(exponent == 0.0, 1.0, jnp.inf))  # (1, C)
        coef = jnp.where(pos, coef, zero_pow)                      # (TILE_K, C)
    else:
        # lambda_coefs == 1: skip the power term entirely.
        coef = jnp.exp(neg_ev_t)

    o_ref[...] = (coef * x).astype(o_ref.dtype)


def laplacian_diffusion_block(x, evals, laplacian_power, diffusion_time,
                              *, with_power=True, max_time=False):
    """x: (K, C), evals: (K,), laplacian_power/diffusion_time: (C,)."""
    K, C = x.shape
    out_dtype = x.dtype

    if max_time:
        diffusion_time = max_time * jax.nn.sigmoid(diffusion_time)

    LANE, SUBLANE = 128, 8
    C_pad = _round_up(C, LANE)                     # lane-dense output (no vst.msk)

    # Tile K; keep double-buffered (x + out) tiles under ~24 MiB (v7x-safe).
    bytes_per_row = C_pad * 4 * 2 * 2              # f32, x+out, double-buffered
    vmem_budget = 24 * 1024 * 1024
    tile_cap = max(SUBLANE, (vmem_budget // bytes_per_row) // SUBLANE * SUBLANE)
    tile_k = min(_round_up(K, SUBLANE), min(tile_cap, 512))
    K_pad = _round_up(K, tile_k)
    grid = (K_pad // tile_k,)

    xf = jnp.pad(x, ((0, K_pad - K), (0, C_pad - C)))
    evals_2d = jnp.pad(evals.astype(jnp.float32).reshape(K, 1),
                       ((0, K_pad - K), (0, 0)), constant_values=1.0)
    time_2d = jnp.pad(diffusion_time.astype(jnp.float32).reshape(1, C),
                      ((0, 0), (0, C_pad - C)))
    power_2d = jnp.pad(laplacian_power.astype(jnp.float32).reshape(1, C),
                       ((0, 0), (0, C_pad - C)))

    kernel = functools.partial(_laplacian_diffusion_kernel, with_power=with_power)

    out = pl.pallas_call(
        kernel,
        out_shape=jax.ShapeDtypeStruct((K_pad, C_pad), out_dtype),
        grid_spec=pltpu.PrefetchScalarGridSpec(
            num_scalar_prefetch=0,
            grid=grid,
            in_specs=[
                pl.BlockSpec((tile_k, C_pad), lambda i: (i, 0)),   # x tile
                pl.BlockSpec((tile_k, 1), lambda i: (i, 0)),       # evals tile
                pl.BlockSpec((1, C_pad), lambda i: (0, 0)),        # time (resident)
                pl.BlockSpec((1, C_pad), lambda i: (0, 0)),        # power (resident)
            ],
            out_specs=pl.BlockSpec((tile_k, C_pad), lambda i: (i, 0)),
        ),
        compiler_params=pltpu.CompilerParams(
            dimension_semantics=("parallel",),          # K rows independent (v7x 2 TCs)
            vmem_limit_bytes=32 * 1024 * 1024,
        ),
    )(xf, evals_2d, time_2d, power_2d)

    return out[:K, :C]


def _reference(x, evals, laplacian_power, diffusion_time,
               with_power=True, max_time=False):
    if max_time:
        diffusion_time = max_time * jax.nn.sigmoid(diffusion_time)
    diffusion_coefs = jnp.exp(-evals[:, None] * jnp.abs(diffusion_time)[None, :])
    if with_power:
        lambda_coefs = jnp.power(
            evals[:, None],
            (2.0 * jax.nn.sigmoid(laplacian_power) - 1.0)[None, :])
    else:
        lambda_coefs = jnp.ones_like(laplacian_power)
    return lambda_coefs * diffusion_coefs * x


# TODO(synk): complex-valued x path is not implemented (the PyTorch module also
# returns NotImplementedError for complex inputs).

if __name__ == "__main__":
    K, C = 8, 32  # spectral modes, channels

    key = jax.random.PRNGKey(0)
    kx, ke, kp, kt = jax.random.split(key, 4)

    x = jax.random.normal(kx, (K, C), dtype=jnp.float32)
    # Laplacian spectrum: first eigenvalue exactly 0 (exercises the 0**p guard),
    # the rest strictly positive.
    evals_pos = jax.random.uniform(ke, (K - 1,), dtype=jnp.float32,
                                   minval=0.1, maxval=2.0)
    evals = jnp.concatenate([jnp.zeros((1,), jnp.float32), evals_pos])

    # 1) Module default init: laplacian_power = 0, diffusion_time = 1e-4.
    laplacian_power = jnp.zeros((C,), dtype=jnp.float32)
    diffusion_time = jnp.full((C,), 1e-4, dtype=jnp.float32)
    y = jax.block_until_ready(
        laplacian_diffusion_block(x, evals, laplacian_power, diffusion_time))
    y_ref = _reference(x, evals, laplacian_power, diffusion_time)
    assert y.shape == (K, C)
    assert jnp.allclose(y, y_ref, rtol=1e-5, atol=1e-5), "mismatch (default init)"

    # 2) Non-trivial learned parameters, strictly positive evals.
    lp = 0.5 * jax.random.normal(kp, (C,), dtype=jnp.float32)
    dt = jax.random.uniform(kt, (C,), dtype=jnp.float32, minval=-0.5, maxval=0.5)
    evals2 = evals_pos[:K - 1]
    x2 = x[:K - 1]
    y2 = jax.block_until_ready(laplacian_diffusion_block(x2, evals2, lp, dt))
    y2_ref = _reference(x2, evals2, lp, dt)
    assert jnp.allclose(y2, y2_ref, rtol=1e-5, atol=1e-5), "mismatch (learned params)"

    # 3) with_power=False path (lambda_coefs == 1).
    y3 = jax.block_until_ready(
        laplacian_diffusion_block(x, evals, lp, dt, with_power=False))
    y3_ref = _reference(x, evals, lp, dt, with_power=False)
    assert jnp.allclose(y3, y3_ref, rtol=1e-5, atol=1e-5), "mismatch (with_power=False)"

    print("KERNEL_OK")
</pallas_src>

<mosaic_0001>
module attributes {stable_mosaic.version = 11 : i64} {
  func.func @_laplacian_diffusion_kernel(%arg0: i32, %arg1: memref<8x128xf32, #tpu.memory_space<vmem>>, %arg2: memref<8x1xf32, #tpu.memory_space<vmem>>, %arg3: memref<1x128xf32, #tpu.memory_space<vmem>>, %arg4: memref<1x128xf32, #tpu.memory_space<vmem>>, %arg5: memref<8x128xf32, #tpu.memory_space<vmem>>) attributes {dimension_semantics = [#tpu.dimension_semantics<parallel>], iteration_bounds = array<i64: 1>, scalar_prefetch = 0 : i64, scratch_operands = 0 : i64, tpu.core_type = #tpu.core_type<tc>, window_params = [{transform_indices = @transform_0, window_bounds = array<i64: 8, 128>}, {transform_indices = @transform_1, window_bounds = array<i64: 8, 1>}, {pipeline_mode = #tpu.pipeline_mode<synchronous>, transform_indices = @transform_2, window_bounds = array<i64: 1, 128>}, {pipeline_mode = #tpu.pipeline_mode<synchronous>, transform_indices = @transform_3, window_bounds = array<i64: 1, 128>}, {transform_indices = @transform_4, window_bounds = array<i64: 8, 128>}]} {
    %c0 = arith.constant 0 : index
    %c0_0 = arith.constant 0 : index
    %0 = vector.load %arg1[%c0, %c0_0] : memref<8x128xf32, #tpu.memory_space<vmem>>, vector<8x128xf32>
    %c0_1 = arith.constant 0 : index
    %c0_2 = arith.constant 0 : index
    %1 = vector.load %arg2[%c0_1, %c0_2] : memref<8x1xf32, #tpu.memory_space<vmem>>, vector<8x1xf32>
    %c0_3 = arith.constant 0 : index
    %c0_4 = arith.constant 0 : index
    %2 = vector.load %arg3[%c0_3, %c0_4] : memref<1x128xf32, #tpu.memory_space<vmem>>, vector<1x128xf32>
    %3 = math.absf %2 : vector<1x128xf32>
    %cst = arith.constant 0.000000e+00 : f32
    %4 = vector.broadcast %cst : f32 to vector<8x1xf32>
    %5 = arith.subf %4, %1 : vector<8x1xf32>
    %6 = vector.broadcast %5 : vector<8x1xf32> to vector<8x128xf32>
    %7 = vector.broadcast %3 : vector<1x128xf32> to vector<8x128xf32>
    %8 = arith.mulf %6, %7 : vector<8x128xf32>
    %c0_5 = arith.constant 0 : index
    %c0_6 = arith.constant 0 : index
    %9 = vector.load %arg4[%c0_5, %c0_6] : memref<1x128xf32, #tpu.memory_space<vmem>>, vector<1x128xf32>
    %10 = arith.negf %9 : vector<1x128xf32>
    %11 = math.exp %10 : vector<1x128xf32>
    %cst_7 = arith.constant 1.000000e+00 : f32
    %12 = vector.broadcast %cst_7 : f32 to vector<1x128xf32>
    %13 = arith.addf %12, %11 : vector<1x128xf32>
    %14 = arith.divf %12, %13 : vector<1x128xf32>
    %cst_8 = arith.constant 2.000000e+00 : f32
    %15 = vector.broadcast %cst_8 : f32 to vector<1x128xf32>
    %16 = arith.mulf %15, %14 : vector<1x128xf32>
    %cst_9 = arith.constant 1.000000e+00 : f32
    %17 = vector.broadcast %cst_9 : f32 to vector<1x128xf32>
    %18 = arith.subf %16, %17 : vector<1x128xf32>
    %cst_10 = arith.constant 0.000000e+00 : f32
    %19 = vector.broadcast %cst_10 : f32 to vector<8x1xf32>
    %20 = arith.cmpf ogt, %1, %19 : vector<8x1xf32>
    %cst_11 = arith.constant 1.000000e+00 : f32
    %21 = vector.broadcast %cst_11 : f32 to vector<8x1xf32>
    %22 = arith.select %20, %1, %21 : vector<8x1xi1>, vector<8x1xf32>
    %23 = math.log %22 : vector<8x1xf32>
    %24 = vector.broadcast %18 : vector<1x128xf32> to vector<8x128xf32>
    %25 = vector.broadcast %23 : vector<8x1xf32> to vector<8x128xf32>
    %26 = arith.mulf %24, %25 : vector<8x128xf32>
    %27 = arith.addf %26, %8 : vector<8x128xf32>
    %28 = math.exp %27 : vector<8x128xf32>
    %cst_12 = arith.constant 0.000000e+00 : f32
    %29 = vector.broadcast %cst_12 : f32 to vector<1x128xf32>
    %30 = arith.cmpf ogt, %18, %29 : vector<1x128xf32>
    %cst_13 = arith.constant 0.000000e+00 : f32
    %31 = vector.broadcast %cst_13 : f32 to vector<1x128xf32>
    %32 = arith.cmpf oeq, %18, %31 : vector<1x128xf32>
    %cst_14 = arith.constant 1.000000e+00 : f32
    %cst_15 = arith.constant 0x7F800000 : f32
    %33 = vector.broadcast %cst_14 : f32 to vector<1x128xf32>
    %34 = vector.broadcast %cst_15 : f32 to vector<1x128xf32>
    %35 = arith.select %32, %33, %34 : vector<1x128xi1>, vector<1x128xf32>
    %cst_16 = arith.constant 0.000000e+00 : f32
    %36 = vector.broadcast %cst_16 : f32 to vector<1x128xf32>
    %37 = arith.select %30, %36, %35 : vector<1x128xi1>, vector<1x128xf32>
    %38 = vector.shape_cast %20 : vector<8x1xi1> to vector<8x1xi1>
    %39 = vector.broadcast %38 : vector<8x1xi1> to vector<8x128xi1>
    %40 = vector.shape_cast %37 : vector<1x128xf32> to vector<1x128xf32>
    %41 = vector.broadcast %40 : vector<1x128xf32> to vector<8x128xf32>
    %42 = arith.select %39, %28, %41 : vector<8x128xi1>, vector<8x128xf32>
    %43 = arith.mulf %42, %0 : vector<8x128xf32>
    %c0_17 = arith.constant 0 : index
    %c0_18 = arith.constant 0 : index
    %44 = vector.load %arg5[%c0_17, %c0_18] : memref<8x128xf32, #tpu.memory_space<vmem>>, vector<8x128xf32>
    tpu.vector_store %arg5[%c0_17, %c0_18], %43 {strides = array<i32>} : memref<8x128xf32, #tpu.memory_space<vmem>>, vector<8x128xf32>,
    return
  }
  func.func @transform_0(%arg0: i32) -> (i32, i32) {
    %c0_i32 = arith.constant 0 : i32
    %c0_i32_0 = arith.constant 0 : i32
    return %arg0, %c0_i32 : i32, i32
  }
  func.func @transform_1(%arg0: i32) -> (i32, i32) {
    %c0_i32 = arith.constant 0 : i32
    %c0_i32_0 = arith.constant 0 : i32
    return %arg0, %c0_i32 : i32, i32
  }
  func.func @transform_2(%arg0: i32) -> (i32, i32) {
    %c0_i32 = arith.constant 0 : i32
    %c0_i32_0 = arith.constant 0 : i32
    %c0_i32_1 = arith.constant 0 : i32
    return %c0_i32, %c0_i32_0 : i32, i32
  }
  func.func @transform_3(%arg0: i32) -> (i32, i32) {
    %c0_i32 = arith.constant 0 : i32
    %c0_i32_0 = arith.constant 0 : i32
    %c0_i32_1 = arith.constant 0 : i32
    return %c0_i32, %c0_i32_0 : i32, i32
  }
  func.func @transform_4(%arg0: i32) -> (i32, i32) {
    %c0_i32 = arith.constant 0 : i32
    %c0_i32_0 = arith.constant 0 : i32
    return %arg0, %c0_i32 : i32, i32
  }
}

</mosaic_0001>

<llo_original>
// kernel: tpu_custom_call.1
$region0: #{tpu_custom_call.1}
  #allocation0 [shape = 'u32[]', space=smem, size = 0x4, offset = 0x4, fixed_abs, tag = 'smem constant byte address 0x4 - core index']
  #allocation1 [shape = 'u32[144,128]{1,0:T(1,128)}', space=vmem, size = 0x12000, scoped, tag = 'internal scratch']
  %s0 = inlined_call_operand.vmem [shape: f32[8,128], index: 0, kind: input, shape index: {}]
  %s1 = inlined_call_operand.vmem [shape: f32[8,1], index: 1, kind: input, shape index: {}]
  %s2 = inlined_call_operand.vmem [shape: f32[1,128], index: 2, kind: input, shape index: {}]
  %s3 = inlined_call_operand.vmem [shape: f32[1,128], index: 3, kind: input, shape index: {}]
  %s4 = inlined_call_operand.hbm [shape: f32[8,128], index: 4, kind: output, shape index: {}]
  %s5 = sld [smem:[#allocation0]]
  $region26: #{tpu_custom_call.1} parent=0
    _
  %s7 = ssub.s32 1, %s5
  %s8 = scalar_select 0, %s7, %s5
  $region1: #{tpu_custom_call.1} parent=0
    #allocation2 [shape = 'u8[4096]{0}', space=vmem, size = 0x1000, scoped, tag = 'output window, operand 0, single buffered']
    #allocation3 [shape = 's32[1]{0}', space=sflag, size = 0x4, scoped, tag = 'scoped memory for tpu_custom_call.1']
    %9 = vsyncpa [#allocation3], 0
    // Predicated region
    $region2: #{tpu_custom_call.1} parent=1 // pred_check
      _
    $region3: #{tpu_custom_call.1} parent=1 // pred_check_branch
      %11 = sbr.rel (0) target = $region5
    $region4: #{tpu_custom_call.1} parent=1 // pred_region
      _
    $region5: #{tpu_custom_call.1} parent=1 // pred_fallthru
      _
    // Predicated region
    $region6: #{tpu_custom_call.1} parent=1 // pred_check
      _
    $region7: #{tpu_custom_call.1} parent=1 // pred_check_branch
      %13 = sbr.rel (0) target = $region9
    $region8: #{tpu_custom_call.1} parent=1 // pred_region
      _
    $region9: #{tpu_custom_call.1} parent=1 // pred_fallthru
      _
    // Predicated region
    $region10: #{tpu_custom_call.1} parent=1 // pred_check
      _
    $region11: #{tpu_custom_call.1} parent=1 // pred_check_branch
      %15 = sbr.rel (0) target = $region13
    $region12: #{tpu_custom_call.1} parent=1 // pred_region
      _
    $region13: #{tpu_custom_call.1} parent=1 // pred_fallthru
      _
    // Predicated region
    $region14: #{tpu_custom_call.1} parent=1 // pred_check
      _
    $region15: #{tpu_custom_call.1} parent=1 // pred_check_branch
      %17 = sbr.rel (0) target = $region17
    $region16: #{tpu_custom_call.1} parent=1 // pred_region
      _
    $region17: #{tpu_custom_call.1} parent=1 // pred_fallthru
      _
    %v18 = vld [vmem:[%s0] sm:$0xff]
    %v19 = vld [vmem:[%s1] sm:$0xff]
    %v20 = vld [vmem:[%s2] sm:$0x1]
    %v21 = vand.u32 2147483647, %v20
    %v22 = vsub.f32 0.0, %v19
    %24 = vset.pattern.permute.xlu0 0
    %25 = vperm.xlu0 %24, %v22
    %v26 = vpop.permute.xlu0 %25
    %v29 = vlaneseq
    %v30 = vshrl.u32 %v29, 7
    %v31 = vsub.s32 0, %v30
    %v32 = vrot.slane %v21, %v31
    %v34 = vmul.f32 %v26, %v32
    %v35 = vld [vmem:[%s3] sm:$0x1]
    %v36 = vxor.u32 %v35, 2147483648
    %v37 = vmul.f32 %v36, 1.442695
    %v38 = vpow.pop %v37
    %v39 = vadd.f32 %v38, 1.0
    %v40 = vrcp.pop %v39
    %v41 = vmul.f32 1.0, %v40
    %v42 = vmul.f32 %v41, 2.0
    %v43 = vsub.f32 %v42, 1.0
    %vm44 = vcmp.gt.f32.partialorder %v19, 0.0
    %v45 = vsel %vm44, %v19, 1.0
    %v46 = vlog2.pop %v45
    %v47 = vmul.f32 %v46, 0.6931472
    %v49 = vlaneseq
    %v50 = vshrl.u32 %v49, 7
    %v51 = vsub.s32 0, %v50
    %v52 = vrot.slane %v43, %v51
    %55 = vset.pattern.permute.xlu0 0
    %56 = vperm.xlu0 %55, %v47
    %v57 = vpop.permute.xlu0 %56
    %v59 = vmul.f32 %v52, %v57
    %v60 = vadd.f32 %v59, %v34
    %v61 = vmul.f32 %v60, 1.442695
    %v62 = vpow.pop %v61
    %vm63 = vcmp.gt.f32.partialorder %v43, 0.0
    %vm64 = vcmp.eq.f32.partialorder %v43, 0.0
    %v65 = vsel %vm64, 1.0, inf
    %v66 = vsel %vm63, 0.0, %v65
    %v67 = vsel %vm44, 1, 0
    %68 = vset.pattern.permute.xlu0 0
    %69 = vperm.xlu0 %68, %v67
    %v70 = vpop.permute.xlu0 %69
    %vm71 = vcmp.eq.s32.totalorder %v70, 1
    %v73 = vlaneseq
    %v74 = vshrl.u32 %v73, 7
    %v75 = vsub.s32 0, %v74
    %v76 = vrot.slane %v66, %v75
    %v78 = vsel %vm71, %v62, %v76
    %v79 = vmul.f32 %v78, %v18
    %80 = vst [vmem:[#allocation2] sm:$0xff] %v79
    // Predicated region
    $region18: #{tpu_custom_call.1} parent=1 // pred_check
      _
    $region19: #{tpu_custom_call.1} parent=1 // pred_check_branch
      %82 = sbr.rel (0) target = $region21
    $region20: #{tpu_custom_call.1} parent=1 // pred_region
      %s84 = ssub.s32 128, 128
      %85 = vsyncadd [#allocation3], %s84
      %s87 = sshll.u32 [#allocation2], 4
      %s88 = int_to_ptr.vmem [resolvable:$true] %s87
      %90 = dma.vmem_to_hbm [thread:$0]  %s88, 128, %s4, [#allocation3]
    $region21: #{tpu_custom_call.1} parent=1 // pred_fallthru
      _
    // Predicated region
    $region22: #{tpu_custom_call.1} parent=1 // pred_check
      _
    $region23: #{tpu_custom_call.1} parent=1 // pred_check_branch
      %92 = sbr.rel (0) target = $region25
    $region24: #{tpu_custom_call.1} parent=1 // pred_region
      %93 = dma.done [#allocation3], 128
    $region25: #{tpu_custom_call.1} parent=1 // pred_fallthru
      _
    %94 = vsyncpa [#allocation3], 1

</llo_original>
